<compile_context>
chip_gen: v6e
topology: v6e:2x2x1
jax: 0.10.0
libtpu: 0.0.40
codegen_flags: <defaults>
</compile_context>

<pallas_src>
import functools

import jax
import jax.numpy as jnp
from jax import lax
from jax.experimental import pallas as pl
from jax.experimental.pallas import tpu as pltpu

EPS = 1e-5          # InstanceNorm2d default eps
NEG_SLOPE = 0.2     # LeakyReLU slope
KH = KW = 4
STRIDE = 2
PAD = 1


def _round_up(x, m):
    return (x + m - 1) // m * m


def _vmem_cap_bytes():
    """Per-core VMEM minus headroom for Mosaic internal scratch/semaphores."""
    try:
        phys = int(pltpu.get_tpu_info().vmem_capacity_bytes)
    except Exception:
        phys = 64 << 20            # conservative fallback (v7x per-core VMEM)
    return int(min(max(phys - (16 << 20), 16 << 20), 112 << 20))


def _pick_tp(p, target):
    """Largest multiple of 16 dividing p and <= target (so no spatial pad);
    fall back to a padded tiling only if no such divisor exists."""
    target = max(int(target), 16)
    best = 0
    d = 16
    while d <= min(p, target):
        if p % d == 0:
            best = d
        d += 16
    if best:
        return best, p                       # pp == p, no padding pass
    tp = _round_up(min(target, p), 16)
    return tp, _round_up(p, tp)


def _im2col_bf16(x):
    """x: [N, Cin, H, W] -> bf16 patches [N, P, Cin*16], K ordered (cin, kh, kw)."""
    n, cin, h, w = x.shape
    ho = (h + 2 * PAD - KH) // STRIDE + 1
    wo = (w + 2 * PAD - KW) // STRIDE + 1
    xp = jnp.pad(x.astype(jnp.bfloat16),
                 ((0, 0), (0, 0), (PAD, PAD), (PAD, PAD)))
    taps = []
    for kh in range(KH):
        for kw in range(KW):
            taps.append(xp[:, :, kh:kh + STRIDE * ho:STRIDE,
                              kw:kw + STRIDE * wo:STRIDE])    # [N, Cin, Ho, Wo]
    t = jnp.stack(taps, axis=0)                               # [16, N, Cin, Ho, Wo]
    t = jnp.transpose(t, (1, 3, 4, 2, 0))                     # [N, Ho, Wo, Cin, 16]
    return t.reshape(n, ho * wo, cin * KH * KW), ho, wo


# ---------------------------------------------------------------------------
# Fused path: whole image resident in VMEM -> conv + exact InstanceNorm + act.
# ---------------------------------------------------------------------------
def _fused_kernel(p_ref, w_ref, o_ref, *, inv_count):
    # p_ref: (P, K) bf16, w_ref: (K, Cp) bf16, o_ref: (P, Cp) f32
    y = jnp.dot(p_ref[...], w_ref[...], preferred_element_type=jnp.float32)
    mean = jnp.sum(y, axis=0, keepdims=True) * inv_count      # (1, Cp)
    d = y - mean
    var = jnp.sum(d * d, axis=0, keepdims=True) * inv_count   # exact two-pass var
    y_n = d * lax.rsqrt(var + EPS)
    o_ref[...] = jnp.where(y_n >= 0, y_n, NEG_SLOPE * y_n).astype(o_ref.dtype)


# ---------------------------------------------------------------------------
# Two-sweep path for large P.
# ---------------------------------------------------------------------------
def _conv_stats_kernel(p_ref, w_ref, y_ref, stats_ref):
    """Sweep 1: conv tile (bf16 MXU, f32 acc), y stored bf16, per-channel
    sum / sum-of-squares accumulated into a (2, Cp) f32 resident block."""
    @pl.when(pl.program_id(1) == 0)
    def _():
        stats_ref[...] = jnp.zeros_like(stats_ref)

    y = jnp.dot(p_ref[...], w_ref[...], preferred_element_type=jnp.float32)
    y_ref[...] = y.astype(y_ref.dtype)
    # Single merged read-modify-write (row 0 = sum(y), row 1 = sum(y*y)).
    stats_ref[...] += jnp.concatenate(
        [jnp.sum(y, axis=0, keepdims=True),
         jnp.sum(y * y, axis=0, keepdims=True)], axis=0)


def _norm_act_kernel(y_ref, stats_ref, o_ref, *, inv_count):
    """Sweep 2: InstanceNorm2d (affine=False) + LeakyReLU(0.2), in place.
    Note: var = E[y^2] - mean^2 is cancellation-prone; clamped at 0. The
    fused path (used whenever VMEM allows) uses the exact two-pass form."""
    y = y_ref[...].astype(jnp.float32)
    mean = stats_ref[pl.ds(0, 1), :] * inv_count               # (1, Cp)
    ex2 = stats_ref[pl.ds(1, 1), :] * inv_count                # (1, Cp)
    var = jnp.maximum(ex2 - mean * mean, 0.0)
    y_n = (y - mean) * lax.rsqrt(var + EPS)
    o_ref[...] = jnp.where(y_n >= 0, y_n, NEG_SLOPE * y_n).astype(o_ref.dtype)


# ---------------------------------------------------------------------------
# Wrapper
# ---------------------------------------------------------------------------
def unet_down(x, weight, *, tp_target=1024, allow_fused=True,
              channels_last_out=False, out_dtype=jnp.float32):
    """UNetDown forward.  x: [N, Cin, H, W] (NCHW), weight: [Cout, Cin, 4, 4].

    channels_last_out=True returns [N, Ho, Wo, Cout] and skips the final NCHW
    transpose (the next layer's im2col wants channels-last anyway)."""
    n, cin, h, w = x.shape
    cout = weight.shape[0]

    patches, ho, wo = _im2col_bf16(x)                          # [N, P, K] bf16
    p = ho * wo
    k = cin * KH * KW

    # Cout padded to 128 lanes for lane-dense output stores; K left unpadded
    # (full-extent block) so no wasted HBM bytes / MXU K work on early layers.
    cp = _round_up(cout, 128)
    w2 = jnp.pad(weight.reshape(cout, k).T.astype(jnp.bfloat16),
                 ((0, 0), (0, cp - cout)))                     # [K, Cp] bf16
    w_bytes = k * cp * 2

    cap = _vmem_cap_bytes()

    # ---- Fused single-kernel path (no HBM y round-trip, no 2nd launch) ----
    fused_bytes = (2 * p * k * 2 + 2 * w_bytes + 2 * p * cp * 4
                   + 4 * p * cp * 4 + (4 << 20))
    if allow_fused and fused_bytes <= cap:
        out = pl.pallas_call(
            functools.partial(_fused_kernel, inv_count=1.0 / p),
            out_shape=jax.ShapeDtypeStruct((n, p, cp), jnp.float32),
            grid_spec=pltpu.PrefetchScalarGridSpec(
                num_scalar_prefetch=0,
                grid=(n,),
                in_specs=[
                    pl.BlockSpec((pl.Squeezed(), p, k), lambda i: (i, 0, 0)),
                    pl.BlockSpec((k, cp), lambda i: (0, 0)),
                ],
                out_specs=pl.BlockSpec((pl.Squeezed(), p, cp),
                                       lambda i: (i, 0, 0)),
            ),
            compiler_params=pltpu.CompilerParams(
                dimension_semantics=("parallel",),
                vmem_limit_bytes=int(min(max(fused_bytes, 16 << 20), cap))),
            cost_estimate=pl.CostEstimate(
                flops=2 * n * p * k * cp + 8 * n * p * cp,
                transcendentals=n * cp,
                bytes_accessed=n * p * k * 2 + w_bytes + n * p * cp * 4),
        )(patches, w2)
        pp = p
    else:
        # ---- Two-sweep path for large P ----
        # Bound the tile size by the VMEM cap (weight block + patch/y buffers).
        denom = 4 * k + 12 * cp
        tp_vmem_max = max(int(((cap * 4) // 5 - 2 * w_bytes - (2 << 20)) // denom), 16)
        tp, pp = _pick_tp(p, min(tp_target, tp_vmem_max))
        if pp != p:  # rare fallback; normally tp divides p and no pad happens
            patches = jnp.pad(patches, ((0, 0), (0, pp - p), (0, 0)))
        n_pt = pp // tp

        # Constant-index weight block: single-buffer it when it is large so
        # deep layers don't hold 2x the full KxCp weight in VMEM (v7x 64 MiB).
        w_kwargs = {}
        if w_bytes >= (2 << 20):
            w_kwargs = dict(pipeline_mode=pl.Buffered(1))
        w_spec = pl.BlockSpec((k, cp), lambda i, j: (0, 0), **w_kwargs)
        wbuf = w_bytes if w_kwargs else 2 * w_bytes

        vmem_k1 = (2 * (tp * k * 2 + tp * cp * 2 + 2 * cp * 4) + wbuf
                   + 2 * tp * cp * 4 + (2 << 20))
        vmem_k2 = 2 * (2 * tp * cp * 2 + 2 * cp * 4) + 2 * tp * cp * 4 + (2 << 20)
        vmem_limit = int(min(max(vmem_k1, vmem_k2, 16 << 20), cap))

        # Sweep 1: conv tiles (y in bf16) + per-(n, c) sum / sum-of-squares.
        # Padded P rows are all-zero -> contribute 0 to both stats rows.
        y, stats = pl.pallas_call(
            _conv_stats_kernel,
            out_shape=(
                jax.ShapeDtypeStruct((n, pp, cp), jnp.bfloat16),
                jax.ShapeDtypeStruct((n, 2, cp), jnp.float32),
            ),
            grid_spec=pltpu.PrefetchScalarGridSpec(
                num_scalar_prefetch=0,
                grid=(n, n_pt),
                in_specs=[
                    pl.BlockSpec((pl.Squeezed(), tp, k), lambda i, j: (i, j, 0)),
                    w_spec,
                ],
                out_specs=[
                    pl.BlockSpec((pl.Squeezed(), tp, cp), lambda i, j: (i, j, 0)),
                    pl.BlockSpec((pl.Squeezed(), 2, cp), lambda i, j: (i, 0, 0)),
                ],
            ),
            compiler_params=pltpu.CompilerParams(
                dimension_semantics=("parallel", "arbitrary"),
                vmem_limit_bytes=vmem_limit),
            cost_estimate=pl.CostEstimate(
                flops=2 * n * pp * k * cp,
                transcendentals=0,
                bytes_accessed=n * pp * k * 2 + w_bytes
                               + n * pp * cp * 2 + n * 2 * cp * 4),
        )(patches, w2)

        # Sweep 2: normalize + LeakyReLU, writing bf16 in place over y.
        out = pl.pallas_call(
            functools.partial(_norm_act_kernel, inv_count=1.0 / p),
            out_shape=jax.ShapeDtypeStruct((n, pp, cp), jnp.bfloat16),
            grid_spec=pltpu.PrefetchScalarGridSpec(
                num_scalar_prefetch=0,
                grid=(n, n_pt),
                in_specs=[
                    pl.BlockSpec((pl.Squeezed(), tp, cp), lambda i, j: (i, j, 0)),
                    pl.BlockSpec((pl.Squeezed(), 2, cp), lambda i, j: (i, 0, 0)),
                ],
                out_specs=pl.BlockSpec((pl.Squeezed(), tp, cp),
                                       lambda i, j: (i, j, 0)),
            ),
            input_output_aliases={0: 0},      # y buffer reused for the output
            compiler_params=pltpu.CompilerParams(
                dimension_semantics=("parallel", "parallel"),
                vmem_limit_bytes=vmem_limit),
            cost_estimate=pl.CostEstimate(
                flops=6 * n * pp * cp,
                transcendentals=n * n_pt * cp,
                bytes_accessed=2 * n * pp * cp * 2 + n * 2 * cp * 4),
        )(y, stats)

    # Strip channel/row padding; default returns NCHW to match nn.Conv2d
    # semantics (channels_last_out=True defers the transpose to the consumer).
    out = out[:, :p, :cout].reshape(n, ho, wo, cout)
    if channels_last_out:
        return out.astype(out_dtype)
    return jnp.transpose(out, (0, 3, 1, 2)).astype(out_dtype)


def _reference(x, weight):
    """Pure-JAX reference of the PyTorch forward pass."""
    y = lax.conv_general_dilated(
        x, weight, window_strides=(STRIDE, STRIDE),
        padding=((PAD, PAD), (PAD, PAD)),
        dimension_numbers=("NCHW", "OIHW", "NCHW"))
    mean = jnp.mean(y, axis=(2, 3), keepdims=True)
    var = jnp.mean(jnp.square(y - mean), axis=(2, 3), keepdims=True)
    y_n = (y - mean) * lax.rsqrt(var + EPS)
    return jnp.where(y_n >= 0, y_n, NEG_SLOPE * y_n)


if __name__ == "__main__":
    key = jax.random.PRNGKey(0)
    kx, kw_ = jax.random.split(key)

    N, C_IN, C_OUT, H, W = 2, 4, 8, 16, 16
    x = jax.random.normal(kx, (N, C_IN, H, W), dtype=jnp.float32)
    # Deterministic synthetic Conv2d weight [Cout, Cin, 4, 4] (bias=False).
    weight = jax.random.normal(kw_, (C_OUT, C_IN, KH, KW), dtype=jnp.float32) * 0.1

    # Tight check vs a reference fed the same bf16-quantized inputs the kernel
    # feeds the MXU, plus a looser check vs the pure-f32 reference.  The
    # two-sweep path additionally stores y / out in bf16, hence its wider tol.
    ref_f32 = _reference(x, weight)
    ref_q = _reference(x.astype(jnp.bfloat16).astype(jnp.float32),
                       weight.astype(jnp.bfloat16).astype(jnp.float32))

    configs = [
        dict(allow_fused=True, tp_target=1024, tol_q=3e-3, tol_f=5e-2),  # fused
        dict(allow_fused=False, tp_target=1024, tol_q=4e-2, tol_f=8e-2),  # 2-sweep, 1 P tile
        dict(allow_fused=False, tp_target=48, tol_q=4e-2, tol_f=8e-2),    # 2-sweep, 2 P tiles
    ]
    for cfg in configs:
        run = jax.jit(functools.partial(
            unet_down, tp_target=cfg["tp_target"], allow_fused=cfg["allow_fused"]))
        out = jax.block_until_ready(run(x, weight))
        assert out.shape == (N, C_OUT, H // 2, W // 2), out.shape
        err_q = float(jnp.max(jnp.abs(out - ref_q)))
        err_f = float(jnp.max(jnp.abs(out - ref_f32)))
        assert err_q < cfg["tol_q"], f"{cfg}: mismatch vs bf16-input ref: {err_q}"
        assert err_f < cfg["tol_f"], f"{cfg}: mismatch vs f32 ref: {err_f}"

    print("KERNEL_OK")
</pallas_src>

<mosaic_0001>
module attributes {stable_mosaic.version = 11 : i64} {
  func.func @_fused_kernel(%arg0: i32, %arg1: memref<1x64x64xbf16, #tpu.memory_space<vmem>>, %arg2: memref<64x128xbf16, #tpu.memory_space<vmem>>, %arg3: memref<1x64x128xf32, #tpu.memory_space<vmem>>) attributes {dimension_semantics = [#tpu.dimension_semantics<parallel>], iteration_bounds = array<i64: 2>, scalar_prefetch = 0 : i64, scratch_operands = 0 : i64, tpu.core_type = #tpu.core_type<tc>, window_params = [{transform_indices = @transform_0, window_bounds = array<i64: 1, 64, 64>}, {pipeline_mode = #tpu.pipeline_mode<synchronous>, transform_indices = @transform_1, window_bounds = array<i64: 64, 128>}, {transform_indices = @transform_2, window_bounds = array<i64: 1, 64, 128>}]} {
    %c0 = arith.constant 0 : index
    %c0_0 = arith.constant 0 : index
    %c0_1 = arith.constant 0 : index
    %0 = vector.load %arg1[%c0, %c0_0, %c0_1] : memref<1x64x64xbf16, #tpu.memory_space<vmem>>, vector<1x64x64xbf16>
    %1 = vector.shape_cast %0 : vector<1x64x64xbf16> to vector<64x64xbf16>
    %c0_2 = arith.constant 0 : index
    %c0_3 = arith.constant 0 : index
    %2 = vector.load %arg2[%c0_2, %c0_3] : memref<64x128xbf16, #tpu.memory_space<vmem>>, vector<64x128xbf16>
    %cst = arith.constant dense<0.000000e+00> : vector<64x128xf32>
    %3 = tpu.matmul %1, %2, %cst {dimension_numbers = #tpu.dot_dimension_numbers<[1], [0], [0], [1], [0, 0, 1, 1], [], []>} : vector<64x64xbf16>, vector<64x128xbf16>, vector<64x128xf32> -> vector<64x128xf32>
    %cst_4 = arith.constant dense<0.000000e+00> : vector<128xf32>
    %4 = vector.multi_reduction <add>, %3, %cst_4 [0] : vector<64x128xf32> to vector<128xf32>
    %5 = vector.shape_cast %4 : vector<128xf32> to vector<1x128xf32>
    %cst_5 = arith.constant 1.562500e-02 : f32
    %6 = vector.broadcast %cst_5 : f32 to vector<1x128xf32>
    %7 = arith.mulf %5, %6 : vector<1x128xf32>
    %8 = vector.broadcast %7 : vector<1x128xf32> to vector<64x128xf32>
    %9 = arith.subf %3, %8 : vector<64x128xf32>
    %10 = arith.mulf %9, %9 : vector<64x128xf32>
    %cst_6 = arith.constant dense<0.000000e+00> : vector<128xf32>
    %11 = vector.multi_reduction <add>, %10, %cst_6 [0] : vector<64x128xf32> to vector<128xf32>
    %12 = vector.shape_cast %11 : vector<128xf32> to vector<1x128xf32>
    %cst_7 = arith.constant 1.562500e-02 : f32
    %13 = vector.broadcast %cst_7 : f32 to vector<1x128xf32>
    %14 = arith.mulf %12, %13 : vector<1x128xf32>
    %cst_8 = arith.constant 9.99999974E-6 : f32
    %15 = vector.broadcast %cst_8 : f32 to vector<1x128xf32>
    %16 = arith.addf %14, %15 : vector<1x128xf32>
    %17 = math.rsqrt %16 : vector<1x128xf32>
    %18 = vector.broadcast %17 : vector<1x128xf32> to vector<64x128xf32>
    %19 = arith.mulf %9, %18 : vector<64x128xf32>
    %cst_9 = arith.constant 0.000000e+00 : f32
    %20 = vector.broadcast %cst_9 : f32 to vector<64x128xf32>
    %21 = arith.cmpf oge, %19, %20 : vector<64x128xf32>
    %cst_10 = arith.constant 2.000000e-01 : f32
    %22 = vector.broadcast %cst_10 : f32 to vector<64x128xf32>
    %23 = arith.mulf %22, %19 : vector<64x128xf32>
    %24 = arith.select %21, %19, %23 : vector<64x128xi1>, vector<64x128xf32>
    %c0_11 = arith.constant 0 : index
    %c0_12 = arith.constant 0 : index
    %c0_13 = arith.constant 0 : index
    %25 = vector.load %arg3[%c0_11, %c0_12, %c0_13] : memref<1x64x128xf32, #tpu.memory_space<vmem>>, vector<1x64x128xf32>
    %26 = vector.shape_cast %25 : vector<1x64x128xf32> to vector<64x128xf32>
    %27 = vector.shape_cast %24 : vector<64x128xf32> to vector<1x64x128xf32>
    tpu.vector_store %arg3[%c0_11, %c0_12, %c0_13], %27 {strides = array<i32>} : memref<1x64x128xf32, #tpu.memory_space<vmem>>, vector<1x64x128xf32>,
    return
  }
  func.func @transform_0(%arg0: i32) -> (i32, i32, i32) {
    %c0_i32 = arith.constant 0 : i32
    %c0_i32_0 = arith.constant 0 : i32
    %c0_i32_1 = arith.constant 0 : i32
    return %arg0, %c0_i32, %c0_i32_0 : i32, i32, i32
  }
  func.func @transform_1(%arg0: i32) -> (i32, i32) {
    %c0_i32 = arith.constant 0 : i32
    %c0_i32_0 = arith.constant 0 : i32
    %c0_i32_1 = arith.constant 0 : i32
    return %c0_i32, %c0_i32_0 : i32, i32
  }
  func.func @transform_2(%arg0: i32) -> (i32, i32, i32) {
    %c0_i32 = arith.constant 0 : i32
    %c0_i32_0 = arith.constant 0 : i32
    %c0_i32_1 = arith.constant 0 : i32
    return %arg0, %c0_i32, %c0_i32_0 : i32, i32, i32
  }
}

</mosaic_0001>

<llo_original>
// kernel: unet_down.1
$region0: #{unet_down.1}
  #allocation0 [shape = 'u32[]', space=smem, size = 0x4, offset = 0x4, fixed_abs, tag = 'smem constant byte address 0x4 - core index']
  #allocation1 [shape = 'u32[144,128]{1,0:T(1,128)}', space=vmem, size = 0x12000, scoped, tag = 'internal scratch']
  %s0 = inlined_call_operand.vmem [shape: bf16[2,64,64], index: 0, kind: input, shape index: {}]
  %s1 = inlined_call_operand.vmem [shape: bf16[64,128], index: 1, kind: input, shape index: {}]
  %s2 = inlined_call_operand.vmem [shape: f32[2,64,128], index: 2, kind: output, shape index: {}]
  %s3 = sld [smem:[#allocation0]]
  $region41: #{unet_down.1} parent=0
    _
  %s5 = ssub.s32 1, %s3
  %s6 = scalar_select 0, %s5, %s3
  loop: start=0, step=1, limit=4
  $region2: #{unet_down.1} parent=0 // loop_pre_header
    _
  $region3: #{unet_down.1} parent=0 // loop_header
    %s8 = sphi 0, %s12
    %p9 = scmp.ge.s32.totalorder %s8, 4
    %s18 = sphi 0, %s20
    %s21 = sphi 0, %s18
    %s22 = sphi 0, %s21
    %s38 = sphi 0, %s22
    %s42 = sphi 0, %s42
    %s44 = sphi 0, %s42
    %s45 = sphi 0, %s44
    %s59 = sphi 0, %s45
    %s65 = sphi 0, %s67
    %s68 = sphi 0, %s65
    %s69 = sphi 0, %s68
    %s85 = sphi 0, %s69
  $region4: #{unet_down.1} parent=0 // loop_header_branch
    %11 = sbr.rel (%p9) target = $region8
  $region5: #{unet_down.1} parent=0 // loop_body
    %s13 = ssub.s32 %s8, 1
    %s14 = ssub.s32 %s8, 2
    %s15 = sadd.s32 %s8, 1
    %s16 = ssub.s32 %s8, %s15
    %p17 = scmp.eq.s32.totalorder %s16, 0
    %s19 = sadd.s32 %s18, 1
    %s20 = scalar_select %p17, %s18, %s19
    %p23 = pneg %p17
    %p24 = scmp.eq.s32.totalorder %s8, 1
    %p25 = por %p23, %p24
    %p26 = scmp.ne.s32.totalorder %s18, %s21
    %p27 = scmp.eq.s32.totalorder %s8, 0
    %p28 = por %p26, %p27
    %p29 = scmp.ne.s32.totalorder %s18, %s21
    %p30 = scmp.eq.s32.totalorder %s13, 1
    %p31 = por %p29, %p30
    %p32 = scmp.ne.s32.totalorder %s21, %s22
    %p33 = scmp.eq.s32.totalorder %s13, 0
    %p34 = por %p32, %p33
    %p35 = scmp.ne.s32.totalorder %s21, %s22
    %p36 = scmp.eq.s32.totalorder %s14, 1
    %p37 = por %p35, %p36
    %p39 = scmp.ne.s32.totalorder %s22, %s38
    %p40 = scmp.eq.s32.totalorder %s14, 0
    %p41 = por %p39, %p40
    %s43 = sadd.s32 %s42, 1
    %p46 = scmp.eq.s32.totalorder %s8, 1
    %p47 = scmp.ne.s32.totalorder %s42, %s44
    %p48 = scmp.eq.s32.totalorder %s8, 0
    %p49 = por %p47, %p48
    %p50 = scmp.ne.s32.totalorder %s42, %s44
    %p51 = scmp.eq.s32.totalorder %s13, 1
    %p52 = por %p50, %p51
    %p53 = scmp.ne.s32.totalorder %s44, %s45
    %p54 = scmp.eq.s32.totalorder %s13, 0
    %p55 = por %p53, %p54
    %p56 = scmp.ne.s32.totalorder %s44, %s45
    %p57 = scmp.eq.s32.totalorder %s14, 1
    %p58 = por %p56, %p57
    %p60 = scmp.ne.s32.totalorder %s45, %s59
    %p61 = scmp.eq.s32.totalorder %s14, 0
    %p62 = por %p60, %p61
    %s63 = ssub.s32 %s8, %s15
    %p64 = scmp.eq.s32.totalorder %s63, 0
    %s66 = sadd.s32 %s65, 1
    %s67 = scalar_select %p64, %s65, %s66
    %p70 = pneg %p64
    %p71 = scmp.eq.s32.totalorder %s8, 1
    %p72 = por %p70, %p71
    %p73 = scmp.ne.s32.totalorder %s65, %s68
    %p74 = scmp.eq.s32.totalorder %s8, 0
    %p75 = por %p73, %p74
    %p76 = scmp.ne.s32.totalorder %s65, %s68
    %p77 = scmp.eq.s32.totalorder %s13, 1
    %p78 = por %p76, %p77
    %p79 = scmp.ne.s32.totalorder %s68, %s69
    %p80 = scmp.eq.s32.totalorder %s13, 0
    %p81 = por %p79, %p80
    %p82 = scmp.ne.s32.totalorder %s68, %s69
    %p83 = scmp.eq.s32.totalorder %s14, 1
    %p84 = por %p82, %p83
    %p86 = scmp.ne.s32.totalorder %s69, %s85
    %p87 = scmp.eq.s32.totalorder %s14, 0
    %p88 = por %p86, %p87
    %p89 = scmp.le.s32.totalorder 1, %s8
    %p90 = scmp.lt.s32.totalorder %s8, 3
    %p91 = pnand %p89, %p90
    %p92 = pneg %p91
    // Predicated region
    $region9: #{unet_down.1} parent=5 // pred_check
      _
    $region10: #{unet_down.1} parent=5 // pred_check_branch
      %94 = sbr.rel (%p91) target = $region12
    $region11: #{unet_down.1} parent=5 // pred_region
      %s95 = ssub.s32 %s8, 1
      // Predicated region
      $region13: #{unet_down.1} parent=11 // pred_check
        %p96 = pneg %p55
      $region14: #{unet_down.1} parent=11 // pred_check_branch
        %98 = sbr.rel (%p96) target = $region16
      $region15: #{unet_down.1} parent=11 // pred_region
        _
      $region16: #{unet_down.1} parent=11 // pred_fallthru
        _
    $region12: #{unet_down.1} parent=5 // pred_fallthru
      _
    %p99 = scmp.lt.s32.totalorder %s8, 2
    // Predicated region
    $region17: #{unet_down.1} parent=5 // pred_check
      %p100 = pneg %p99
    $region18: #{unet_down.1} parent=5 // pred_check_branch
      %102 = sbr.rel (%p100) target = $region20
    $region19: #{unet_down.1} parent=5 // pred_region
      // Predicated region
      $region21: #{unet_down.1} parent=19 // pred_check
        %p103 = pneg %p28
      $region22: #{unet_down.1} parent=19 // pred_check_branch
        %105 = sbr.rel (%p103) target = $region24
      $region23: #{unet_down.1} parent=19 // pred_region
        %p106 = scmp.lt.s32.totalorder %s8, 1
        %s107 = scalar_select %p106, %s8, 1
        %s108 = smul.addr %s107, 8
        %s109 = smul.addr %s108, 4
        %s110 = scalar_lea.vmem %s0, %s109
      $region24: #{unet_down.1} parent=19 // pred_fallthru
        _
    $region20: #{unet_down.1} parent=5 // pred_fallthru
      _
    %p111 = scmp.le.s32.totalorder 1, %s8
    %p112 = scmp.lt.s32.totalorder %s8, 3
    %p113 = pnand %p111, %p112
    %p114 = pneg %p113
    // Predicated region
    $region25: #{unet_down.1} parent=5 // pred_check
      _
    $region26: #{unet_down.1} parent=5 // pred_check_branch
      %116 = sbr.rel (%p113) target = $region28
    $region27: #{unet_down.1} parent=5 // pred_region
      %s117 = ssub.s32 %s8, 1
      %p118 = scmp.lt.s32.totalorder %s13, 1
      %s119 = scalar_select %p118, %s13, 1
      %s120 = smul.addr %s119, 8
      %s121 = smul.addr %s120, 4
      %s122 = scalar_lea.vmem %s0, %s121
      %p123 = pneg %p34
      %p124 = pneg %p31
      %p125 = pneg %p55
      %p126 = pneg %p52
      %p127 = pneg %p81
      %p128 = pneg %p78
      %p129 = scmp.lt.s32.totalorder %s13, 1
      %s130 = scalar_select %p129, %s13, 1
      %s131 = smul.addr %s130, 8
      %s132 = smul.addr %s131, 8
      %s133 = scalar_lea.vmem %s2, %s132
      %p134 = scmp.lt.s32.totalorder %s13, 1
      %s135 = scalar_select %p134, %s13, 1
      %s136 = smul.addr %s135, 8
      %s137 = smul.addr %s136, 4
      %s138 = scalar_lea.vmem %s0, %s137
      %p139 = scmp.lt.s32.totalorder %s13, 1
      %s140 = scalar_select %p139, %s13, 1
      %s141 = smul.addr %s140, 8
      %s142 = smul.addr %s141, 8
      %s143 = scalar_lea.vmem %s2, %s142
      %v145 = vld [vmem:[%s138] sm:$0xf]
      %v146 = vld [vmem:[%s138 + $0x4] sm:$0xf]
      %v147 = vld [vmem:[%s138 + $0x8] sm:$0xf]
      %v148 = vld [vmem:[%s138 + $0xc] sm:$0xf]
      %v149 = vld [vmem:[%s138 + $0x10] sm:$0xf]
      %v150 = vld [vmem:[%s138 + $0x14] sm:$0xf]
      %v151 = vld [vmem:[%s138 + $0x18] sm:$0xf]
      %v152 = vld [vmem:[%s138 + $0x1c] sm:$0xf]
      %v153 = vld [vmem:[%s1] sm:$0xf]
      %v154 = vld [vmem:[%s1 + $0x4] sm:$0xf]
      %v155 = vld [vmem:[%s1 + $0x8] sm:$0xf]
      %v156 = vld [vmem:[%s1 + $0xc] sm:$0xf]
      %v157 = vld [vmem:[%s1 + $0x10] sm:$0xf]
      %v158 = vld [vmem:[%s1 + $0x14] sm:$0xf]
      %v159 = vld [vmem:[%s1 + $0x18] sm:$0xf]
      %v160 = vld [vmem:[%s1 + $0x1c] sm:$0xf]
      %v169 = vunpack.c.l.b16 %v145
      %v170 = vunpack.c.l.b16 %v146
      %v171 = vunpack.c.l.b16 %v147
      %v172 = vunpack.c.l.b16 %v148
      %v173 = vunpack.c.l.b16 %v149
      %v174 = vunpack.c.l.b16 %v150
      %v175 = vunpack.c.l.b16 %v151
      %v176 = vunpack.c.l.b16 %v152
      %v177 = vpack.c.b16 %v170, %v169
      %v178 = vpack.c.b16 %v172, %v171
      %v179 = vpack.c.b16 %v174, %v173
      %v180 = vpack.c.b16 %v176, %v175
      %v189 = vunpack.c.l.b16 %v153
      %v190 = vunpack.c.l.b16 %v154
      %v191 = vunpack.c.l.b16 %v155
      %v192 = vunpack.c.l.b16 %v156
      %v193 = vunpack.c.l.b16 %v157
      %v194 = vunpack.c.l.b16 %v158
      %v195 = vunpack.c.l.b16 %v159
      %v196 = vunpack.c.l.b16 %v160
      %v197 = vpack.c.b16 %v190, %v189
      %v198 = vpack.c.b16 %v192, %v191
      %v199 = vpack.c.b16 %v194, %v193
      %v200 = vpack.c.b16 %v196, %v195
      %vm205 = vcmask 523264
      %v207 = vsel %vm205, %v177, 0
      %v210 = vsel %vm205, %v178, 0
      %v213 = vsel %vm205, %v179, 0
      %v216 = vsel %vm205, %v180, 0
      %218 = vmatprep.subr.bf16.mxu0 0
      %219 = vmatpush1.bf16.msra.mxu0 0
      %220 = vmatprep.subr.bf16.mxu0 0
      %221 = vmatpush1.bf16.msra.mxu0 0
      %222 = vmatprep.subr.bf16.mxu0 0
      %223 = vmatpush1.bf16.msra.mxu0 0
      %224 = vmatprep.subr.bf16.mxu0 0
      %225 = vmatpush1.bf16.msra.mxu0 0
      %226 = vmatprep.subr.bf16.mxu0 0
      %227 = vmatpush1.bf16.msra.mxu0 %v200
      %228 = vmatprep.subr.bf16.mxu0 0
      %229 = vmatpush1.bf16.msra.mxu0 %v199
      %230 = vmatprep.subr.bf16.mxu0 0
      %231 = vmatpush1.bf16.msra.mxu0 %v198
      %232 = vmatprep.subr.bf16.mxu0 0
      %233 = vmatpush1.bf16.msra.mxu0 %v197
      %234 = vmatprep.subr.bf16.mxu0 0
      %235 = vmatpush2.bf16.msra.mxu0 0
      %236 = vmatprep.subr.bf16.mxu0 0
      %237 = vmatpush2.bf16.msra.mxu0 0
      %238 = vmatprep.subr.bf16.mxu0 0
      %239 = vmatpush2.bf16.msra.mxu0 0
      %240 = vmatprep.subr.bf16.mxu0 0
      %241 = vmatpush2.bf16.msra.mxu0 0
      %242 = vmatprep.subr.bf16.mxu0 0
      %243 = vmatpush2.bf16.msra.mxu0 0
      %244 = vmatprep.subr.bf16.mxu0 0
      %245 = vmatpush2.bf16.msra.mxu0 0
      %246 = vmatprep.subr.bf16.mxu0 0
      %247 = vmatpush2.bf16.msra.mxu0 0
      %248 = vmatprep.subr.bf16.mxu0 0
      %249 = vmatpush2.bf16.msra.mxu0 0
      %250 = vmatprep.mubr.bf16.mxu0 0
      %251 = vmatmul.mubr.bf16.gmra.mxu0 %v207
      %v252 = vpop.f32.mrf.mxu0
      %v253 = vadd.f32 0.0, %v252
      %v254 = vpop.f32.mrf.mxu0
      %v255 = vpop.f32.mrf.mxu0
      %v256 = vadd.f32 0.0, %v255
      %v257 = vpop.f32.mrf.mxu0
      %258 = vmatprep.mubr.bf16.mxu0 0
      %259 = vmatmul.mubr.bf16.gmra.mxu0 %v210
      %v260 = vpop.f32.mrf.mxu0
      %v261 = vadd.f32 0.0, %v260
      %v262 = vpop.f32.mrf.mxu0
      %v263 = vpop.f32.mrf.mxu0
      %v264 = vadd.f32 0.0, %v263
      %v265 = vpop.f32.mrf.mxu0
      %266 = vmatprep.mubr.bf16.mxu0 0
      %267 = vmatmul.mubr.bf16.gmra.mxu0 %v213
      %v268 = vpop.f32.mrf.mxu0
      %v269 = vadd.f32 0.0, %v268
      %v270 = vpop.f32.mrf.mxu0
      %v271 = vpop.f32.mrf.mxu0
      %v272 = vadd.f32 0.0, %v271
      %v273 = vpop.f32.mrf.mxu0
      %274 = vmatprep.mubr.bf16.mxu0 0
      %275 = vmatmul.mubr.bf16.gmra.mxu0 %v216
      %v276 = vpop.f32.mrf.mxu0
      %v277 = vadd.f32 0.0, %v276
      %v278 = vpop.f32.mrf.mxu0
      %v279 = vpop.f32.mrf.mxu0
      %v280 = vadd.f32 0.0, %v279
      %v281 = vpop.f32.mrf.mxu0
      %282 = vdwg.mxu0
      %v283 = vadd.f32 %v253, %v256
      %v284 = vadd.f32 %v283, %v261
      %v285 = vadd.f32 %v284, %v264
      %v286 = vadd.f32 %v285, %v269
      %v287 = vadd.f32 %v286, %v272
      %v288 = vadd.f32 %v287, %v277
      %v289 = vadd.f32 %v288, %v280
      %v290 = vrot.slane %v289, 4
      %v291 = vadd.f32 %v289, %v290
      %v292 = vrot.slane %v291, 2
      %v293 = vadd.f32 %v291, %v292
      %v294 = vrot.slane %v293, 1
      %v295 = vadd.f32 %v293, %v294
      %v296 = vmul.f32 %v295, 0.015625
      %v297 = vsub.f32 %v253, %v296
      %v298 = vsub.f32 %v256, %v296
      %v299 = vsub.f32 %v261, %v296
      %v300 = vsub.f32 %v264, %v296
      %v301 = vsub.f32 %v269, %v296
      %v302 = vsub.f32 %v272, %v296
      %v303 = vsub.f32 %v277, %v296
      %v304 = vsub.f32 %v280, %v296
      %v305 = vmul.f32 %v297, %v297
      %v306 = vmul.f32 %v298, %v298
      %v307 = vmul.f32 %v299, %v299
      %v308 = vmul.f32 %v300, %v300
      %v309 = vmul.f32 %v301, %v301
      %v310 = vmul.f32 %v302, %v302
      %v311 = vmul.f32 %v303, %v303
      %v312 = vmul.f32 %v304, %v304
      %v313 = vadd.f32 %v305, %v306
      %v314 = vadd.f32 %v313, %v307
      %v315 = vadd.f32 %v314, %v308
      %v316 = vadd.f32 %v315, %v309
      %v317 = vadd.f32 %v316, %v310
      %v318 = vadd.f32 %v317, %v311
      %v319 = vadd.f32 %v318, %v312
      %v320 = vrot.slane %v319, 4
      %v321 = vadd.f32 %v319, %v320
      %v322 = vrot.slane %v321, 2
      %v323 = vadd.f32 %v321, %v322
      %v324 = vrot.slane %v323, 1
      %v325 = vadd.f32 %v323, %v324
      %v326 = vmul.f32 %v325, 0.015625
      %v327 = vadd.f32 %v326, 1e-05
      %v328 = vrsqrt.pop %v327
      %v329 = vmul.f32 %v297, %v328
      %v330 = vmul.f32 %v298, %v328
      %v331 = vmul.f32 %v299, %v328
      %v332 = vmul.f32 %v300, %v328
      %v333 = vmul.f32 %v301, %v328
      %v334 = vmul.f32 %v302, %v328
      %v335 = vmul.f32 %v303, %v328
      %v336 = vmul.f32 %v304, %v328
      %vm337 = vcmp.ge.f32.partialorder %v329, 0.0
      %vm338 = vcmp.ge.f32.partialorder %v330, 0.0
      %vm339 = vcmp.ge.f32.partialorder %v331, 0.0
      %vm340 = vcmp.ge.f32.partialorder %v332, 0.0
      %vm341 = vcmp.ge.f32.partialorder %v333, 0.0
      %vm342 = vcmp.ge.f32.partialorder %v334, 0.0
      %vm343 = vcmp.ge.f32.partialorder %v335, 0.0
      %vm344 = vcmp.ge.f32.partialorder %v336, 0.0
      %v345 = vmul.f32 %v329, 0.2
      %v346 = vmul.f32 %v330, 0.2
      %v347 = vmul.f32 %v331, 0.2
      %v348 = vmul.f32 %v332, 0.2
      %v349 = vmul.f32 %v333, 0.2
      %v350 = vmul.f32 %v334, 0.2
      %v351 = vmul.f32 %v335, 0.2
      %v352 = vmul.f32 %v336, 0.2
      %v353 = vsel %vm337, %v329, %v345
      %v354 = vsel %vm338, %v330, %v346
      %v355 = vsel %vm339, %v331, %v347
      %v356 = vsel %vm340, %v332, %v348
      %v357 = vsel %vm341, %v333, %v349
      %v358 = vsel %vm342, %v334, %v350
      %v359 = vsel %vm343, %v335, %v351
      %v360 = vsel %vm344, %v336, %v352
      %361 = vst [vmem:[%s143] sm:$0xff] %v353
      %362 = vst [vmem:[%s143 + $0x8] sm:$0xff] %v354
      %363 = vst [vmem:[%s143 + $0x10] sm:$0xff] %v355
      %364 = vst [vmem:[%s143 + $0x18] sm:$0xff] %v356
      %365 = vst [vmem:[%s143 + $0x20] sm:$0xff] %v357
      %366 = vst [vmem:[%s143 + $0x28] sm:$0xff] %v358
      %367 = vst [vmem:[%s143 + $0x30] sm:$0xff] %v359
      %368 = vst [vmem:[%s143 + $0x38] sm:$0xff] %v360
      %p369 = scmp.lt.s32.totalorder %s13, 1
      %s370 = scalar_select %p369, %s13, 1
      %s371 = smul.addr %s370, 8
      %s372 = smul.addr %s371, 8
      %s373 = scalar_lea.vmem %s2, %s372
      // Predicated region
      $region29: #{unet_down.1} parent=27 // pred_check
        %p374 = pneg %p78
      $region30: #{unet_down.1} parent=27 // pred_check_branch
        %376 = sbr.rel (%p374) target = $region32
      $region31: #{unet_down.1} parent=27 // pred_region
        _
      $region32: #{unet_down.1} parent=27 // pred_fallthru
        _
    $region28: #{unet_down.1} parent=5 // pred_fallthru
      _
    %p377 = scmp.le.s32.totalorder 2, %s8
    // Predicated region
    $region33: #{unet_down.1} parent=5 // pred_check
      %p378 = pneg %p377
    $region34: #{unet_down.1} parent=5 // pred_check_branch
      %380 = sbr.rel (%p378) target = $region36
    $region35: #{unet_down.1} parent=5 // pred_region
      %s381 = ssub.s32 %s8, 2
      // Predicated region
      $region37: #{unet_down.1} parent=35 // pred_check
        %p382 = pneg %p84
      $region38: #{unet_down.1} parent=35 // pred_check_branch
        %384 = sbr.rel (%p382) target = $region40
      $region39: #{unet_down.1} parent=35 // pred_region
        %p385 = scmp.lt.s32.totalorder %s14, 1
        %s386 = scalar_select %p385, %s14, 1
        %s387 = smul.addr %s386, 8
        %s388 = smul.addr %s387, 8
        %s389 = scalar_lea.vmem %s2, %s388
      $region40: #{unet_down.1} parent=35 // pred_fallthru
        _
    $region36: #{unet_down.1} parent=5 // pred_fallthru
      _
  $region6: #{unet_down.1} parent=0 // loop_footer
    %s12 = sadd.s32 1, %s8
  $region7: #{unet_down.1} parent=0 // loop_footer_branch
    %7 = sbr.rel target = $region3
  $region8: #{unet_down.1} parent=0 // loop_exit
    _

</llo_original>
